<compile_context>
chip_gen: v6e
topology: v6e:2x2x1
jax: 0.10.0
libtpu: 0.0.40
codegen_flags: <defaults>
</compile_context>

<pallas_src>
import functools

import jax
import jax.numpy as jnp
from jax.experimental import pallas as pl
from jax.experimental.pallas import tpu as pltpu


def _round_up(x, m):
    return ((x + m - 1) // m) * m


def _roberta_output_kernel(h_ref, x_ref, w_ref, b_ref, g_ref, beta_ref, o_ref,
                           *, eps, matmul_dtype):
    # h_ref: [TM, Din]  x_ref: [TM, H]  w_ref: [Din, H] (resident)
    # b_ref/g_ref/beta_ref: f32 [1, H] (resident)       o_ref: [TM, H]
    h = h_ref[...]
    if matmul_dtype is not None and h.dtype != matmul_dtype:
        h = h.astype(matmul_dtype)

    # Dense: MXU matmul with f32 accumulation.
    y = jnp.dot(h, w_ref[...], preferred_element_type=jnp.float32)
    y = y + b_ref[...]

    # Dropout: inference mode -> identity.
    # TODO(synk): training-mode dropout (pltpu.prng_seed / prng_random_bits mask)
    # is not wired in; this kernel implements eval-mode forward only.

    # Residual add (f32).
    y = y + x_ref[...].astype(jnp.float32)

    # LayerNorm over the hidden axis, per token, in f32.
    mean = jnp.mean(y, axis=-1, keepdims=True)
    centered = y - mean
    var = jnp.mean(centered * centered, axis=-1, keepdims=True)
    inv = jax.lax.rsqrt(var + eps)
    out = centered * (inv * g_ref[...]) + beta_ref[...]

    o_ref[...] = out.astype(o_ref.dtype)


def roberta_output(hidden_states, input_tensor, dense_w_t, dense_b,
                   ln_gamma, ln_beta, *, eps=1e-12, block_tokens=None,
                   matmul_dtype=None, vmem_budget_bytes=56 * 1024 * 1024):
    """Fused RobertaOutput forward (eval mode).

    hidden_states: [B, S, Din]
    input_tensor : [B, S, H]
    dense_w_t    : [Din, H]  (PyTorch weight [H, Din] transposed ONCE at load time)
    dense_b, ln_gamma, ln_beta: [H]
    matmul_dtype : optional dtype to run the MXU in (e.g. jnp.bfloat16 on v5e
                   when the model ships f32 params); None keeps native dtype.
    """
    B, S, Din = hidden_states.shape
    H = input_tensor.shape[-1]
    T = B * S

    h2d = hidden_states.reshape(T, Din)
    x2d = input_tensor.reshape(T, H)

    if matmul_dtype is not None:
        dense_w_t = dense_w_t.astype(matmul_dtype)

    # LN / bias params as f32 [1, H]: no per-tile casts inside the kernel.
    b = dense_b.reshape(1, H).astype(jnp.float32)
    g = ln_gamma.reshape(1, H).astype(jnp.float32)
    beta = ln_beta.reshape(1, H).astype(jnp.float32)

    act_isz = jnp.dtype(h2d.dtype).itemsize
    res_isz = jnp.dtype(x2d.dtype).itemsize
    w_isz = jnp.dtype(dense_w_t.dtype).itemsize
    out_dtype = hidden_states.dtype
    out_isz = jnp.dtype(out_dtype).itemsize

    # Sublane granule for the token (second-minor) axis depends on dtype packing.
    granule = {4: 8, 2: 16, 1: 32}.get(act_isz, 8)

    if block_tokens is None:
        block_tokens = 1024 if H <= 1024 else 512

    # Token tile: as large as possible, but guarantee >= 2 grid steps (when T
    # allows) so megacore parts split the grid across both TensorCores.
    if T <= granule:
        tm = granule
    else:
        tm = min(block_tokens, _round_up(pl.cdiv(T, 2), granule))
    tm = max(tm, granule)

    def footprint(tm_):
        return (Din * H * w_isz              # resident weight (single-buffered)
                + 2 * tm_ * Din * act_isz    # double-buffered h tiles
                + 2 * tm_ * H * res_isz      # double-buffered residual tiles
                + 2 * tm_ * H * out_isz      # double-buffered out tiles
                + 3 * H * 4)                 # bias / gamma / beta (f32)

    # Shrink the token tile until the working set fits the per-core budget.
    while footprint(tm) > vmem_budget_bytes and tm > granule:
        tm = max(granule, _round_up(tm // 2, granule))

    grid = (pl.cdiv(T, tm),)
    vmem_limit = int(min(max(1.4 * footprint(tm) + (4 << 20), 16 << 20), 100 << 20))

    cost = pl.CostEstimate(
        flops=2 * T * Din * H,
        bytes_accessed=(T * Din * act_isz + T * H * res_isz + T * H * out_isz
                        + Din * H * w_isz + 3 * H * 4),
        transcendentals=0,
    )

    kernel = functools.partial(_roberta_output_kernel, eps=eps,
                               matmul_dtype=matmul_dtype)

    def build(single_buffer_resident):
        resident = ({"pipeline_mode": pl.Buffered(1)}
                    if single_buffer_resident else {})
        return pl.pallas_call(
            kernel,
            out_shape=jax.ShapeDtypeStruct((T, H), out_dtype),
            grid_spec=pltpu.PrefetchScalarGridSpec(
                num_scalar_prefetch=0,
                grid=grid,
                in_specs=[
                    pl.BlockSpec((tm, Din), lambda i: (i, 0)),              # h tile
                    pl.BlockSpec((tm, H), lambda i: (i, 0)),                # residual
                    pl.BlockSpec((Din, H), lambda i: (0, 0), **resident),   # weight
                    pl.BlockSpec((1, H), lambda i: (0, 0), **resident),     # bias
                    pl.BlockSpec((1, H), lambda i: (0, 0), **resident),     # gamma
                    pl.BlockSpec((1, H), lambda i: (0, 0), **resident),     # beta
                ],
                out_specs=pl.BlockSpec((tm, H), lambda i: (i, 0)),
            ),
            compiler_params=pltpu.CompilerParams(
                dimension_semantics=("parallel",),
                vmem_limit_bytes=vmem_limit,
            ),
            cost_estimate=cost,
        )

    try:
        out2d = build(True)(h2d, x2d, dense_w_t, b, g, beta)
    except Exception:
        # Fallback: same kernel with default (double) buffering for residents.
        out2d = build(False)(h2d, x2d, dense_w_t, b, g, beta)

    return out2d.reshape(B, S, H)


if __name__ == "__main__":
    # Small config consistent with the module's forward.
    B, S = 2, 8
    DENSE_DIM = 64      # config.dense_dim
    HIDDEN = 32         # config.hidden_size
    EPS = 1e-12         # config.layer_norm_eps

    key = jax.random.PRNGKey(0)
    k1, k2, k3, k4 = jax.random.split(key, 4)

    hidden_states = jax.random.normal(k1, (B, S, DENSE_DIM), dtype=jnp.float32)
    input_tensor = jax.random.normal(k2, (B, S, HIDDEN), dtype=jnp.float32)

    # Deterministic synthetic parameters (PyTorch layout: weight is [H, Din]).
    dense_w = 0.02 * jax.random.normal(k3, (HIDDEN, DENSE_DIM), dtype=jnp.float32)
    dense_b = 0.01 * jax.random.normal(k4, (HIDDEN,), dtype=jnp.float32)
    ln_gamma = jnp.ones((HIDDEN,), dtype=jnp.float32)
    ln_beta = jnp.zeros((HIDDEN,), dtype=jnp.float32)

    # One-time parameter prep (done at load time, not per forward call).
    dense_w_t = jnp.asarray(dense_w.T)   # [Din, H]

    out = roberta_output(hidden_states, input_tensor, dense_w_t, dense_b,
                         ln_gamma, ln_beta, eps=EPS)
    out = jax.block_until_ready(out)

    # Pure-JAX reference check.
    y_ref = jnp.einsum("bsd,hd->bsh", hidden_states, dense_w) + dense_b
    y_ref = y_ref + input_tensor
    mu = jnp.mean(y_ref, axis=-1, keepdims=True)
    var = jnp.mean((y_ref - mu) ** 2, axis=-1, keepdims=True)
    ref = (y_ref - mu) * jax.lax.rsqrt(var + EPS) * ln_gamma + ln_beta

    assert out.shape == (B, S, HIDDEN)
    assert jnp.allclose(out, ref, atol=1e-5, rtol=1e-5)
    print("KERNEL_OK")
</pallas_src>

<mosaic_0001>
module attributes {stable_mosaic.version = 11 : i64} {
  func.func @_roberta_output_kernel(%arg0: i32, %arg1: memref<8x64xf32, #tpu.memory_space<vmem>>, %arg2: memref<8x32xf32, #tpu.memory_space<vmem>>, %arg3: memref<64x32xf32, #tpu.memory_space<vmem>>, %arg4: memref<1x32xf32, #tpu.memory_space<vmem>>, %arg5: memref<1x32xf32, #tpu.memory_space<vmem>>, %arg6: memref<1x32xf32, #tpu.memory_space<vmem>>, %arg7: memref<8x32xf32, #tpu.memory_space<vmem>>) attributes {dimension_semantics = [#tpu.dimension_semantics<parallel>], iteration_bounds = array<i64: 2>, scalar_prefetch = 0 : i64, scratch_operands = 0 : i64, tpu.core_type = #tpu.core_type<tc>, window_params = [{transform_indices = @transform_0, window_bounds = array<i64: 8, 64>}, {transform_indices = @transform_1, window_bounds = array<i64: 8, 32>}, {pipeline_mode = #tpu.pipeline_mode<synchronous>, transform_indices = @transform_2, window_bounds = array<i64: 64, 32>}, {pipeline_mode = #tpu.pipeline_mode<synchronous>, transform_indices = @transform_3, window_bounds = array<i64: 1, 32>}, {pipeline_mode = #tpu.pipeline_mode<synchronous>, transform_indices = @transform_4, window_bounds = array<i64: 1, 32>}, {pipeline_mode = #tpu.pipeline_mode<synchronous>, transform_indices = @transform_5, window_bounds = array<i64: 1, 32>}, {transform_indices = @transform_6, window_bounds = array<i64: 8, 32>}]} {
    %c0 = arith.constant 0 : index
    %c0_0 = arith.constant 0 : index
    %0 = vector.load %arg1[%c0, %c0_0] : memref<8x64xf32, #tpu.memory_space<vmem>>, vector<8x64xf32>
    %c0_1 = arith.constant 0 : index
    %c0_2 = arith.constant 0 : index
    %1 = vector.load %arg3[%c0_1, %c0_2] : memref<64x32xf32, #tpu.memory_space<vmem>>, vector<64x32xf32>
    %cst = arith.constant dense<0.000000e+00> : vector<8x32xf32>
    %2 = tpu.matmul %0, %1, %cst {dimension_numbers = #tpu.dot_dimension_numbers<[1], [0], [0], [1], [0, 0, 1, 1], [], []>} : vector<8x64xf32>, vector<64x32xf32>, vector<8x32xf32> -> vector<8x32xf32>
    %c0_3 = arith.constant 0 : index
    %c0_4 = arith.constant 0 : index
    %3 = vector.load %arg4[%c0_3, %c0_4] : memref<1x32xf32, #tpu.memory_space<vmem>>, vector<1x32xf32>
    %4 = vector.broadcast %3 : vector<1x32xf32> to vector<8x32xf32>
    %5 = arith.addf %2, %4 : vector<8x32xf32>
    %c0_5 = arith.constant 0 : index
    %c0_6 = arith.constant 0 : index
    %6 = vector.load %arg2[%c0_5, %c0_6] : memref<8x32xf32, #tpu.memory_space<vmem>>, vector<8x32xf32>
    %7 = arith.addf %5, %6 : vector<8x32xf32>
    %cst_7 = arith.constant dense<0.000000e+00> : vector<8xf32>
    %8 = vector.multi_reduction <add>, %7, %cst_7 [1] : vector<8x32xf32> to vector<8xf32>
    %9 = vector.shape_cast %8 : vector<8xf32> to vector<8x1xf32>
    %cst_8 = arith.constant 3.200000e+01 : f32
    %10 = vector.broadcast %cst_8 : f32 to vector<8x1xf32>
    %11 = arith.divf %9, %10 : vector<8x1xf32>
    %12 = vector.broadcast %11 : vector<8x1xf32> to vector<8x32xf32>
    %13 = arith.subf %7, %12 : vector<8x32xf32>
    %14 = arith.mulf %13, %13 : vector<8x32xf32>
    %cst_9 = arith.constant dense<0.000000e+00> : vector<8xf32>
    %15 = vector.multi_reduction <add>, %14, %cst_9 [1] : vector<8x32xf32> to vector<8xf32>
    %16 = vector.shape_cast %15 : vector<8xf32> to vector<8x1xf32>
    %cst_10 = arith.constant 3.200000e+01 : f32
    %17 = vector.broadcast %cst_10 : f32 to vector<8x1xf32>
    %18 = arith.divf %16, %17 : vector<8x1xf32>
    %cst_11 = arith.constant 9.99999996E-13 : f32
    %19 = vector.broadcast %cst_11 : f32 to vector<8x1xf32>
    %20 = arith.addf %18, %19 : vector<8x1xf32>
    %21 = math.rsqrt %20 : vector<8x1xf32>
    %c0_12 = arith.constant 0 : index
    %c0_13 = arith.constant 0 : index
    %22 = vector.load %arg5[%c0_12, %c0_13] : memref<1x32xf32, #tpu.memory_space<vmem>>, vector<1x32xf32>
    %23 = vector.broadcast %21 : vector<8x1xf32> to vector<8x32xf32>
    %24 = vector.broadcast %22 : vector<1x32xf32> to vector<8x32xf32>
    %25 = arith.mulf %23, %24 : vector<8x32xf32>
    %26 = arith.mulf %13, %25 : vector<8x32xf32>
    %c0_14 = arith.constant 0 : index
    %c0_15 = arith.constant 0 : index
    %27 = vector.load %arg6[%c0_14, %c0_15] : memref<1x32xf32, #tpu.memory_space<vmem>>, vector<1x32xf32>
    %28 = vector.broadcast %27 : vector<1x32xf32> to vector<8x32xf32>
    %29 = arith.addf %26, %28 : vector<8x32xf32>
    %c0_16 = arith.constant 0 : index
    %c0_17 = arith.constant 0 : index
    %30 = vector.load %arg7[%c0_16, %c0_17] : memref<8x32xf32, #tpu.memory_space<vmem>>, vector<8x32xf32>
    tpu.vector_store %arg7[%c0_16, %c0_17], %29 {strides = array<i32>} : memref<8x32xf32, #tpu.memory_space<vmem>>, vector<8x32xf32>,
    return
  }
  func.func @transform_0(%arg0: i32) -> (i32, i32) {
    %c0_i32 = arith.constant 0 : i32
    %c0_i32_0 = arith.constant 0 : i32
    return %arg0, %c0_i32 : i32, i32
  }
  func.func @transform_1(%arg0: i32) -> (i32, i32) {
    %c0_i32 = arith.constant 0 : i32
    %c0_i32_0 = arith.constant 0 : i32
    return %arg0, %c0_i32 : i32, i32
  }
  func.func @transform_2(%arg0: i32) -> (i32, i32) {
    %c0_i32 = arith.constant 0 : i32
    %c0_i32_0 = arith.constant 0 : i32
    %c0_i32_1 = arith.constant 0 : i32
    return %c0_i32, %c0_i32_0 : i32, i32
  }
  func.func @transform_3(%arg0: i32) -> (i32, i32) {
    %c0_i32 = arith.constant 0 : i32
    %c0_i32_0 = arith.constant 0 : i32
    %c0_i32_1 = arith.constant 0 : i32
    return %c0_i32, %c0_i32_0 : i32, i32
  }
  func.func @transform_4(%arg0: i32) -> (i32, i32) {
    %c0_i32 = arith.constant 0 : i32
    %c0_i32_0 = arith.constant 0 : i32
    %c0_i32_1 = arith.constant 0 : i32
    return %c0_i32, %c0_i32_0 : i32, i32
  }
  func.func @transform_5(%arg0: i32) -> (i32, i32) {
    %c0_i32 = arith.constant 0 : i32
    %c0_i32_0 = arith.constant 0 : i32
    %c0_i32_1 = arith.constant 0 : i32
    return %c0_i32, %c0_i32_0 : i32, i32
  }
  func.func @transform_6(%arg0: i32) -> (i32, i32) {
    %c0_i32 = arith.constant 0 : i32
    %c0_i32_0 = arith.constant 0 : i32
    return %arg0, %c0_i32 : i32, i32
  }
}

module attributes {stable_mosaic.version = 11 : i64} {
  func.func @_roberta_output_kernel(%arg0: i32, %arg1: memref<8x64xf32, #tpu.memory_space<vmem>>, %arg2: memref<8x32xf32, #tpu.memory_space<vmem>>, %arg3: memref<64x32xf32, #tpu.memory_space<vmem>>, %arg4: memref<1x32xf32, #tpu.memory_space<vmem>>, %arg5: memref<1x32xf32, #tpu.memory_space<vmem>>, %arg6: memref<1x32xf32, #tpu.memory_space<vmem>>, %arg7: memref<8x32xf32, #tpu.memory_space<vmem>>) attributes {dimension_semantics = [#tpu.dimension_semantics<parallel>], iteration_bounds = array<i64: 2>, scalar_prefetch = 0 : i64, scratch_operands = 0 : i64, tpu.core_type = #tpu.core_type<tc>, window_params = [{transform_indices = @transform_0, window_bounds = array<i64: 8, 64>}, {transform_indices = @transform_1, window_bounds = array<i64: 8, 32>}, {pipeline_mode = #tpu.pipeline_mode<synchronous>, transform_indices = @transform_2, window_bounds = array<i64: 64, 32>}, {pipeline_mode = #tpu.pipeline_mode<synchronous>, transform_indices = @transform_3, window_bounds = array<i64: 1, 32>}, {pipeline_mode = #tpu.pipeline_mode<synchronous>, transform_indices = @transform_4, window_bounds = array<i64: 1, 32>}, {pipeline_mode = #tpu.pipeline_mode<synchronous>, transform_indices = @transform_5, window_bounds = array<i64: 1, 32>}, {transform_indices = @transform_6, window_bounds = array<i64: 8, 32>}]} {
    %c0 = arith.constant 0 : index
    %c0_0 = arith.constant 0 : index
    %0 = vector.load %arg1[%c0, %c0_0] : memref<8x64xf32, #tpu.memory_space<vmem>>, vector<8x64xf32>
    %c0_1 = arith.constant 0 : index
    %c0_2 = arith.constant 0 : index
    %1 = vector.load %arg3[%c0_1, %c0_2] : memref<64x32xf32, #tpu.memory_space<vmem>>, vector<64x32xf32>
    %cst = arith.constant dense<0.000000e+00> : vector<8x32xf32>
    %2 = tpu.matmul %0, %1, %cst {dimension_numbers = #tpu.dot_dimension_numbers<[1], [0], [0], [1], [0, 0, 1, 1], [], []>} : vector<8x64xf32>, vector<64x32xf32>, vector<8x32xf32> -> vector<8x32xf32>
    %c0_3 = arith.constant 0 : index
    %c0_4 = arith.constant 0 : index
    %3 = vector.load %arg4[%c0_3, %c0_4] : memref<1x32xf32, #tpu.memory_space<vmem>>, vector<1x32xf32>
    %4 = vector.broadcast %3 : vector<1x32xf32> to vector<8x32xf32>
    %5 = arith.addf %2, %4 : vector<8x32xf32>
    %c0_5 = arith.constant 0 : index
    %c0_6 = arith.constant 0 : index
    %6 = vector.load %arg2[%c0_5, %c0_6] : memref<8x32xf32, #tpu.memory_space<vmem>>, vector<8x32xf32>
    %7 = arith.addf %5, %6 : vector<8x32xf32>
    %cst_7 = arith.constant dense<0.000000e+00> : vector<8xf32>
    %8 = vector.multi_reduction <add>, %7, %cst_7 [1] : vector<8x32xf32> to vector<8xf32>
    %9 = vector.shape_cast %8 : vector<8xf32> to vector<8x1xf32>
    %cst_8 = arith.constant 3.200000e+01 : f32
    %10 = vector.broadcast %cst_8 : f32 to vector<8x1xf32>
    %11 = arith.divf %9, %10 : vector<8x1xf32>
    %12 = vector.broadcast %11 : vector<8x1xf32> to vector<8x32xf32>
    %13 = arith.subf %7, %12 : vector<8x32xf32>
    %14 = arith.mulf %13, %13 : vector<8x32xf32>
    %cst_9 = arith.constant dense<0.000000e+00> : vector<8xf32>
    %15 = vector.multi_reduction <add>, %14, %cst_9 [1] : vector<8x32xf32> to vector<8xf32>
    %16 = vector.shape_cast %15 : vector<8xf32> to vector<8x1xf32>
    %cst_10 = arith.constant 3.200000e+01 : f32
    %17 = vector.broadcast %cst_10 : f32 to vector<8x1xf32>
    %18 = arith.divf %16, %17 : vector<8x1xf32>
    %cst_11 = arith.constant 9.99999996E-13 : f32
    %19 = vector.broadcast %cst_11 : f32 to vector<8x1xf32>
    %20 = arith.addf %18, %19 : vector<8x1xf32>
    %21 = math.rsqrt %20 : vector<8x1xf32>
    %c0_12 = arith.constant 0 : index
    %c0_13 = arith.constant 0 : index
    %22 = vector.load %arg5[%c0_12, %c0_13] : memref<1x32xf32, #tpu.memory_space<vmem>>, vector<1x32xf32>
    %23 = vector.broadcast %21 : vector<8x1xf32> to vector<8x32xf32>
    %24 = vector.broadcast %22 : vector<1x32xf32> to vector<8x32xf32>
    %25 = arith.mulf %23, %24 : vector<8x32xf32>
    %26 = arith.mulf %13, %25 : vector<8x32xf32>
    %c0_14 = arith.constant 0 : index
    %c0_15 = arith.constant 0 : index
    %27 = vector.load %arg6[%c0_14, %c0_15] : memref<1x32xf32, #tpu.memory_space<vmem>>, vector<1x32xf32>
    %28 = vector.broadcast %27 : vector<1x32xf32> to vector<8x32xf32>
    %29 = arith.addf %26, %28 : vector<8x32xf32>
    %c0_16 = arith.constant 0 : index
    %c0_17 = arith.constant 0 : index
    %30 = vector.load %arg7[%c0_16, %c0_17] : memref<8x32xf32, #tpu.memory_space<vmem>>, vector<8x32xf32>
    tpu.vector_store %arg7[%c0_16, %c0_17], %29 {strides = array<i32>} : memref<8x32xf32, #tpu.memory_space<vmem>>, vector<8x32xf32>,
    return
  }
  func.func @transform_0(%arg0: i32) -> (i32, i32) {
    %c0_i32 = arith.constant 0 : i32
    %c0_i32_0 = arith.constant 0 : i32
    return %arg0, %c0_i32 : i32, i32
  }
  func.func @transform_1(%arg0: i32) -> (i32, i32) {
    %c0_i32 = arith.constant 0 : i32
    %c0_i32_0 = arith.constant 0 : i32
    return %arg0, %c0_i32 : i32, i32
  }
  func.func @transform_2(%arg0: i32) -> (i32, i32) {
    %c0_i32 = arith.constant 0 : i32
    %c0_i32_0 = arith.constant 0 : i32
    %c0_i32_1 = arith.constant 0 : i32
    return %c0_i32, %c0_i32_0 : i32, i32
  }
  func.func @transform_3(%arg0: i32) -> (i32, i32) {
    %c0_i32 = arith.constant 0 : i32
    %c0_i32_0 = arith.constant 0 : i32
    %c0_i32_1 = arith.constant 0 : i32
    return %c0_i32, %c0_i32_0 : i32, i32
  }
  func.func @transform_4(%arg0: i32) -> (i32, i32) {
    %c0_i32 = arith.constant 0 : i32
    %c0_i32_0 = arith.constant 0 : i32
    %c0_i32_1 = arith.constant 0 : i32
    return %c0_i32, %c0_i32_0 : i32, i32
  }
  func.func @transform_5(%arg0: i32) -> (i32, i32) {
    %c0_i32 = arith.constant 0 : i32
    %c0_i32_0 = arith.constant 0 : i32
    %c0_i32_1 = arith.constant 0 : i32
    return %c0_i32, %c0_i32_0 : i32, i32
  }
  func.func @transform_6(%arg0: i32) -> (i32, i32) {
    %c0_i32 = arith.constant 0 : i32
    %c0_i32_0 = arith.constant 0 : i32
    return %arg0, %c0_i32 : i32, i32
  }
}

</mosaic_0001>

<llo_original>
// kernel: tpu_custom_call.1
$region0: #{tpu_custom_call.1}
  #allocation0 [shape = 'u32[]', space=smem, size = 0x4, offset = 0x4, fixed_abs, tag = 'smem constant byte address 0x4 - core index']
  #allocation1 [shape = 'u32[144,128]{1,0:T(1,128)}', space=vmem, size = 0x12000, scoped, tag = 'internal scratch']
  %s0 = inlined_call_operand.vmem [shape: f32[16,64], index: 0, kind: input, shape index: {}]
  %s1 = inlined_call_operand.vmem [shape: f32[16,32], index: 1, kind: input, shape index: {}]
  %s2 = inlined_call_operand.vmem [shape: f32[64,32], index: 2, kind: input, shape index: {}]
  %s3 = inlined_call_operand.vmem [shape: f32[1,32], index: 3, kind: input, shape index: {}]
  %s4 = inlined_call_operand.vmem [shape: f32[1,32], index: 4, kind: input, shape index: {}]
  %s5 = inlined_call_operand.vmem [shape: f32[1,32], index: 5, kind: input, shape index: {}]
  %s6 = inlined_call_operand.hbm [shape: f32[16,32], index: 6, kind: output, shape index: {}]
  %s7 = sld [smem:[#allocation0]]
  $region57: #{tpu_custom_call.1} parent=0
    _
  %s9 = ssub.s32 1, %s7
  %s10 = scalar_select 0, %s9, %s7
  $region1: #{tpu_custom_call.1} parent=0
    #allocation2 [shape = 'u8[8192]{0}', space=vmem, size = 0x2000, scoped, tag = 'output window, operand 0']
    #allocation3 [shape = 's32[2]{0}', space=sflag, size = 0x8, scoped, tag = 'scoped memory for tpu_custom_call.1']
    %11 = vsyncpa [#allocation3], 0
    %s12 = scalar_lea.sflag [#allocation3], 1
    %13 = vsyncpa %s12, 0
    loop: start=0, step=1, limit=4
    $region2: #{tpu_custom_call.1} parent=1 // loop_pre_header
      _
    $region3: #{tpu_custom_call.1} parent=1 // loop_header
      %s15 = sphi 0, %s19
      %p16 = scmp.ge.s32.totalorder %s15, 4
      %s25 = sphi 0, %s27
      %s28 = sphi 0, %s25
      %s29 = sphi 0, %s28
      %s45 = sphi 0, %s29
      %s51 = sphi 0, %s53
      %s54 = sphi 0, %s51
      %s55 = sphi 0, %s54
      %s71 = sphi 0, %s55
      %s75 = sphi 0, %s75
      %s77 = sphi 0, %s75
      %s78 = sphi 0, %s77
      %s92 = sphi 0, %s78
      %s96 = sphi 0, %s96
      %s98 = sphi 0, %s96
      %s99 = sphi 0, %s98
      %s113 = sphi 0, %s99
      %s117 = sphi 0, %s117
      %s119 = sphi 0, %s117
      %s120 = sphi 0, %s119
      %s134 = sphi 0, %s120
      %s138 = sphi 0, %s138
      %s140 = sphi 0, %s138
      %s141 = sphi 0, %s140
      %s155 = sphi 0, %s141
      %s161 = sphi 0, %s163
      %s164 = sphi 0, %s161
      %s165 = sphi 0, %s164
      %s181 = sphi 0, %s165
    $region4: #{tpu_custom_call.1} parent=1 // loop_header_branch
      %18 = sbr.rel (%p16) target = $region8
    $region5: #{tpu_custom_call.1} parent=1 // loop_body
      %s20 = ssub.s32 %s15, 1
      %s21 = ssub.s32 %s15, 2
      %s22 = sadd.s32 %s15, 1
      %s23 = ssub.s32 %s15, %s22
      %p24 = scmp.eq.s32.totalorder %s23, 0
      %s26 = sadd.s32 %s25, 1
      %s27 = scalar_select %p24, %s25, %s26
      %p30 = pneg %p24
      %p31 = scmp.eq.s32.totalorder %s15, 1
      %p32 = por %p30, %p31
      %p33 = scmp.ne.s32.totalorder %s25, %s28
      %p34 = scmp.eq.s32.totalorder %s15, 0
      %p35 = por %p33, %p34
      %p36 = scmp.ne.s32.totalorder %s25, %s28
      %p37 = scmp.eq.s32.totalorder %s20, 1
      %p38 = por %p36, %p37
      %p39 = scmp.ne.s32.totalorder %s28, %s29
      %p40 = scmp.eq.s32.totalorder %s20, 0
      %p41 = por %p39, %p40
      %p42 = scmp.ne.s32.totalorder %s28, %s29
      %p43 = scmp.eq.s32.totalorder %s21, 1
      %p44 = por %p42, %p43
      %p46 = scmp.ne.s32.totalorder %s29, %s45
      %p47 = scmp.eq.s32.totalorder %s21, 0
      %p48 = por %p46, %p47
      %s49 = ssub.s32 %s15, %s22
      %p50 = scmp.eq.s32.totalorder %s49, 0
      %s52 = sadd.s32 %s51, 1
      %s53 = scalar_select %p50, %s51, %s52
      %p56 = pneg %p50
      %p57 = scmp.eq.s32.totalorder %s15, 1
      %p58 = por %p56, %p57
      %p59 = scmp.ne.s32.totalorder %s51, %s54
      %p60 = scmp.eq.s32.totalorder %s15, 0
      %p61 = por %p59, %p60
      %p62 = scmp.ne.s32.totalorder %s51, %s54
      %p63 = scmp.eq.s32.totalorder %s20, 1
      %p64 = por %p62, %p63
      %p65 = scmp.ne.s32.totalorder %s54, %s55
      %p66 = scmp.eq.s32.totalorder %s20, 0
      %p67 = por %p65, %p66
      %p68 = scmp.ne.s32.totalorder %s54, %s55
      %p69 = scmp.eq.s32.totalorder %s21, 1
      %p70 = por %p68, %p69
      %p72 = scmp.ne.s32.totalorder %s55, %s71
      %p73 = scmp.eq.s32.totalorder %s21, 0
      %p74 = por %p72, %p73
      %s76 = sadd.s32 %s75, 1
      %p79 = scmp.eq.s32.totalorder %s15, 1
      %p80 = scmp.ne.s32.totalorder %s75, %s77
      %p81 = scmp.eq.s32.totalorder %s15, 0
      %p82 = por %p80, %p81
      %p83 = scmp.ne.s32.totalorder %s75, %s77
      %p84 = scmp.eq.s32.totalorder %s20, 1
      %p85 = por %p83, %p84
      %p86 = scmp.ne.s32.totalorder %s77, %s78
      %p87 = scmp.eq.s32.totalorder %s20, 0
      %p88 = por %p86, %p87
      %p89 = scmp.ne.s32.totalorder %s77, %s78
      %p90 = scmp.eq.s32.totalorder %s21, 1
      %p91 = por %p89, %p90
      %p93 = scmp.ne.s32.totalorder %s78, %s92
      %p94 = scmp.eq.s32.totalorder %s21, 0
      %p95 = por %p93, %p94
      %s97 = sadd.s32 %s96, 1
      %p100 = scmp.eq.s32.totalorder %s15, 1
      %p101 = scmp.ne.s32.totalorder %s96, %s98
      %p102 = scmp.eq.s32.totalorder %s15, 0
      %p103 = por %p101, %p102
      %p104 = scmp.ne.s32.totalorder %s96, %s98
      %p105 = scmp.eq.s32.totalorder %s20, 1
      %p106 = por %p104, %p105
      %p107 = scmp.ne.s32.totalorder %s98, %s99
      %p108 = scmp.eq.s32.totalorder %s20, 0
      %p109 = por %p107, %p108
      %p110 = scmp.ne.s32.totalorder %s98, %s99
      %p111 = scmp.eq.s32.totalorder %s21, 1
      %p112 = por %p110, %p111
      %p114 = scmp.ne.s32.totalorder %s99, %s113
      %p115 = scmp.eq.s32.totalorder %s21, 0
      %p116 = por %p114, %p115
      %s118 = sadd.s32 %s117, 1
      %p121 = scmp.eq.s32.totalorder %s15, 1
      %p122 = scmp.ne.s32.totalorder %s117, %s119
      %p123 = scmp.eq.s32.totalorder %s15, 0
      %p124 = por %p122, %p123
      %p125 = scmp.ne.s32.totalorder %s117, %s119
      %p126 = scmp.eq.s32.totalorder %s20, 1
      %p127 = por %p125, %p126
      %p128 = scmp.ne.s32.totalorder %s119, %s120
      %p129 = scmp.eq.s32.totalorder %s20, 0
      %p130 = por %p128, %p129
      %p131 = scmp.ne.s32.totalorder %s119, %s120
      %p132 = scmp.eq.s32.totalorder %s21, 1
      %p133 = por %p131, %p132
      %p135 = scmp.ne.s32.totalorder %s120, %s134
      %p136 = scmp.eq.s32.totalorder %s21, 0
      %p137 = por %p135, %p136
      %s139 = sadd.s32 %s138, 1
      %p142 = scmp.eq.s32.totalorder %s15, 1
      %p143 = scmp.ne.s32.totalorder %s138, %s140
      %p144 = scmp.eq.s32.totalorder %s15, 0
      %p145 = por %p143, %p144
      %p146 = scmp.ne.s32.totalorder %s138, %s140
      %p147 = scmp.eq.s32.totalorder %s20, 1
      %p148 = por %p146, %p147
      %p149 = scmp.ne.s32.totalorder %s140, %s141
      %p150 = scmp.eq.s32.totalorder %s20, 0
      %p151 = por %p149, %p150
      %p152 = scmp.ne.s32.totalorder %s140, %s141
      %p153 = scmp.eq.s32.totalorder %s21, 1
      %p154 = por %p152, %p153
      %p156 = scmp.ne.s32.totalorder %s141, %s155
      %p157 = scmp.eq.s32.totalorder %s21, 0
      %p158 = por %p156, %p157
      %s159 = ssub.s32 %s15, %s22
      %p160 = scmp.eq.s32.totalorder %s159, 0
      %s162 = sadd.s32 %s161, 1
      %s163 = scalar_select %p160, %s161, %s162
      %p166 = pneg %p160
      %p167 = scmp.eq.s32.totalorder %s15, 1
      %p168 = por %p166, %p167
      %p169 = scmp.ne.s32.totalorder %s161, %s164
      %p170 = scmp.eq.s32.totalorder %s15, 0
      %p171 = por %p169, %p170
      %p172 = scmp.ne.s32.totalorder %s161, %s164
      %p173 = scmp.eq.s32.totalorder %s20, 1
      %p174 = por %p172, %p173
      %p175 = scmp.ne.s32.totalorder %s164, %s165
      %p176 = scmp.eq.s32.totalorder %s20, 0
      %p177 = por %p175, %p176
      %p178 = scmp.ne.s32.totalorder %s164, %s165
      %p179 = scmp.eq.s32.totalorder %s21, 1
      %p180 = por %p178, %p179
      %p182 = scmp.ne.s32.totalorder %s165, %s181
      %p183 = scmp.eq.s32.totalorder %s21, 0
      %p184 = por %p182, %p183
      %p185 = scmp.le.s32.totalorder 1, %s15
      %p186 = scmp.lt.s32.totalorder %s15, 3
      %p187 = pnand %p185, %p186
      %p188 = pneg %p187
      // Predicated region
      $region9: #{tpu_custom_call.1} parent=5 // pred_check
        _
      $region10: #{tpu_custom_call.1} parent=5 // pred_check_branch
        %190 = sbr.rel (%p187) target = $region12
      $region11: #{tpu_custom_call.1} parent=5 // pred_region
        %s191 = ssub.s32 %s15, 1
        // Predicated region
        $region13: #{tpu_custom_call.1} parent=11 // pred_check
          %p192 = pneg %p88
        $region14: #{tpu_custom_call.1} parent=11 // pred_check_branch
          %194 = sbr.rel (%p192) target = $region16
        $region15: #{tpu_custom_call.1} parent=11 // pred_region
          _
        $region16: #{tpu_custom_call.1} parent=11 // pred_fallthru
          _
        // Predicated region
        $region17: #{tpu_custom_call.1} parent=11 // pred_check
          %p195 = pneg %p109
        $region18: #{tpu_custom_call.1} parent=11 // pred_check_branch
          %197 = sbr.rel (%p195) target = $region20
        $region19: #{tpu_custom_call.1} parent=11 // pred_region
          _
        $region20: #{tpu_custom_call.1} parent=11 // pred_fallthru
          _
        // Predicated region
        $region21: #{tpu_custom_call.1} parent=11 // pred_check
          %p198 = pneg %p130
        $region22: #{tpu_custom_call.1} parent=11 // pred_check_branch
          %200 = sbr.rel (%p198) target = $region24
        $region23: #{tpu_custom_call.1} parent=11 // pred_region
          _
        $region24: #{tpu_custom_call.1} parent=11 // pred_fallthru
          _
        // Predicated region
        $region25: #{tpu_custom_call.1} parent=11 // pred_check
          %p201 = pneg %p151
        $region26: #{tpu_custom_call.1} parent=11 // pred_check_branch
          %203 = sbr.rel (%p201) target = $region28
        $region27: #{tpu_custom_call.1} parent=11 // pred_region
          _
        $region28: #{tpu_custom_call.1} parent=11 // pred_fallthru
          _
      $region12: #{tpu_custom_call.1} parent=5 // pred_fallthru
        _
      %p204 = scmp.lt.s32.totalorder %s15, 2
      // Predicated region
      $region29: #{tpu_custom_call.1} parent=5 // pred_check
        %p205 = pneg %p204
      $region30: #{tpu_custom_call.1} parent=5 // pred_check_branch
        %207 = sbr.rel (%p205) target = $region32
      $region31: #{tpu_custom_call.1} parent=5 // pred_region
        // Predicated region
        $region33: #{tpu_custom_call.1} parent=31 // pred_check
          %p208 = pneg %p35
        $region34: #{tpu_custom_call.1} parent=31 // pred_check_branch
          %210 = sbr.rel (%p208) target = $region36
        $region35: #{tpu_custom_call.1} parent=31 // pred_region
          %p211 = scmp.lt.s32.totalorder %s15, 1
          %s212 = scalar_select %p211, %s15, 1
          %s213 = smul.addr %s212, 8
          %s214 = scalar_lea.vmem %s0, %s213
        $region36: #{tpu_custom_call.1} parent=31 // pred_fallthru
          _
        // Predicated region
        $region37: #{tpu_custom_call.1} parent=31 // pred_check
          %p215 = pneg %p61
        $region38: #{tpu_custom_call.1} parent=31 // pred_check_branch
          %217 = sbr.rel (%p215) target = $region40
        $region39: #{tpu_custom_call.1} parent=31 // pred_region
          %p218 = scmp.lt.s32.totalorder %s15, 1
          %s219 = scalar_select %p218, %s15, 1
          %s220 = smul.addr %s219, 8
          %s221 = scalar_lea.vmem %s1, %s220
        $region40: #{tpu_custom_call.1} parent=31 // pred_fallthru
          _
      $region32: #{tpu_custom_call.1} parent=5 // pred_fallthru
        _
      %p222 = scmp.le.s32.totalorder 1, %s15
      %p223 = scmp.lt.s32.totalorder %s15, 3
      %p224 = pnand %p222, %p223
      %p225 = pneg %p224
      // Predicated region
      $region41: #{tpu_custom_call.1} parent=5 // pred_check
        _
      $region42: #{tpu_custom_call.1} parent=5 // pred_check_branch
        %227 = sbr.rel (%p224) target = $region44
      $region43: #{tpu_custom_call.1} parent=5 // pred_region
        %s228 = ssub.s32 %s15, 1
        %p229 = scmp.lt.s32.totalorder %s20, 1
        %s230 = scalar_select %p229, %s20, 1
        %s231 = smul.addr %s230, 8
        %s232 = scalar_lea.vmem %s0, %s231
        %p233 = pneg %p41
        %p234 = pneg %p38
        %p235 = scmp.lt.s32.totalorder %s20, 1
        %s236 = scalar_select %p235, %s20, 1
        %s237 = smul.addr %s236, 8
        %s238 = scalar_lea.vmem %s1, %s237
        %p239 = pneg %p67
        %p240 = pneg %p64
        %p241 = pneg %p88
        %p242 = pneg %p85
        %p243 = pneg %p109
        %p244 = pneg %p106
        %p245 = pneg %p130
        %p246 = pneg %p127
        %p247 = pneg %p151
        %p248 = pneg %p148
        %p249 = pneg %p177
        %p250 = pneg %p174
        %s251 = sand.u32 %s164, 1
        %s252 = scalar_lea.sflag [#allocation3], %s251
        %s253 = sand.u32 %s164, 1
        %s254 = smul.addr %s253, 8
        %s255 = scalar_lea.vmem [#allocation2], %s254
        %p256 = scmp.lt.s32.totalorder %s20, 1
        %s257 = scalar_select %p256, %s20, 1
        %s258 = smul.addr %s257, 8
        %s259 = scalar_lea.vmem %s0, %s258
        %p260 = scmp.lt.s32.totalorder %s20, 1
        %s261 = scalar_select %p260, %s20, 1
        %s262 = smul.addr %s261, 8
        %s263 = scalar_lea.vmem %s1, %s262
        %v264 = vld [vmem:[%s259] sm:$0xff]
        %v265 = vld [vmem:[%s2] sm:$0xff]
        %v266 = vld [vmem:[%s2 + $0x8] sm:$0xff]
        %v267 = vld [vmem:[%s2 + $0x10] sm:$0xff]
        %v268 = vld [vmem:[%s2 + $0x18] sm:$0xff]
        %v269 = vld [vmem:[%s2 + $0x20] sm:$0xff]
        %v270 = vld [vmem:[%s2 + $0x28] sm:$0xff]
        %v271 = vld [vmem:[%s2 + $0x30] sm:$0xff]
        %v272 = vld [vmem:[%s2 + $0x38] sm:$0xff]
        %v273 = vld [vmem:[%s3] sm:$0x1]
        %v275 = vlaneseq
        %v276 = vshrl.u32 %v275, 7
        %v277 = vsub.s32 0, %v276
        %v278 = vrot.slane %v273, %v277
        %vm280 = vcmask 523264
        %v282 = vsel %vm280, %v264, 0
        %284 = vmatprep.subr.mxu0 0.0
        %285 = vmatpush1.msra.mxu0 0.0
        %286 = vmatprep.subr.mxu0 0.0
        %287 = vmatpush1.msra.mxu0 0.0
        %288 = vmatprep.subr.mxu0 0.0
        %289 = vmatpush1.msra.mxu0 0.0
        %290 = vmatprep.subr.mxu0 0.0
        %291 = vmatpush1.msra.mxu0 0.0
        %292 = vmatprep.subr.mxu0 0.0
        %293 = vmatpush1.msra.mxu0 0.0
        %294 = vmatprep.subr.mxu0 0.0
        %295 = vmatpush1.msra.mxu0 0.0
        %296 = vmatprep.subr.mxu0 0.0
        %297 = vmatpush1.msra.mxu0 0.0
        %298 = vmatprep.subr.mxu0 0.0
        %299 = vmatpush1.msra.mxu0 0.0
        %300 = vmatprep.subr.mxu0 0.0
        %301 = vmatpush1.msra.mxu0 %v272
        %302 = vmatprep.subr.mxu0 0.0
        %303 = vmatpush1.msra.mxu0 %v271
        %304 = vmatprep.subr.mxu0 0.0
        %305 = vmatpush1.msra.mxu0 %v270
        %306 = vmatprep.subr.mxu0 0.0
        %307 = vmatpush1.msra.mxu0 %v269
        %308 = vmatprep.subr.mxu0 0.0
        %309 = vmatpush1.msra.mxu0 %v268
        %310 = vmatprep.subr.mxu0 0.0
        %311 = vmatpush1.msra.mxu0 %v267
        %312 = vmatprep.subr.mxu0 0.0
        %313 = vmatpush1.msra.mxu0 %v266
        %314 = vmatprep.subr.mxu0 0.0
        %315 = vmatpush1.msra.mxu0 %v265
        %316 = vmatprep.subr.mxu0 0.0
        %317 = vmatpush2.msra.mxu0 0.0
        %318 = vmatprep.subr.mxu0 0.0
        %319 = vmatpush2.msra.mxu0 0.0
        %320 = vmatprep.subr.mxu0 0.0
        %321 = vmatpush2.msra.mxu0 0.0
        %322 = vmatprep.subr.mxu0 0.0
        %323 = vmatpush2.msra.mxu0 0.0
        %324 = vmatprep.subr.mxu0 0.0
        %325 = vmatpush2.msra.mxu0 0.0
        %326 = vmatprep.subr.mxu0 0.0
        %327 = vmatpush2.msra.mxu0 0.0
        %328 = vmatprep.subr.mxu0 0.0
        %329 = vmatpush2.msra.mxu0 0.0
        %330 = vmatprep.subr.mxu0 0.0
        %331 = vmatpush2.msra.mxu0 0.0
        %332 = vmatprep.subr.mxu0 0.0
        %333 = vmatpush2.msra.mxu0 0.0
        %334 = vmatprep.subr.mxu0 0.0
        %335 = vmatpush2.msra.mxu0 0.0
        %336 = vmatprep.subr.mxu0 0.0
        %337 = vmatpush2.msra.mxu0 0.0
        %338 = vmatprep.subr.mxu0 0.0
        %339 = vmatpush2.msra.mxu0 0.0
        %340 = vmatprep.subr.mxu0 0.0
        %341 = vmatpush2.msra.mxu0 0.0
        %342 = vmatprep.subr.mxu0 0.0
        %343 = vmatpush2.msra.mxu0 0.0
        %344 = vmatprep.subr.mxu0 0.0
        %345 = vmatpush2.msra.mxu0 0.0
        %346 = vmatprep.subr.mxu0 0.0
        %347 = vmatpush2.msra.mxu0 0.0
        %348 = vmatprep.mubr.f32.mxu0 0.0
        %349 = vmatmul.mubr.f32.gmra.mxu0 %v282
        %v350 = vpop.f32.mrf.mxu0
        %v351 = vadd.f32 %v278, %v350
        %v352 = vpop.f32.mrf.mxu0
        %353 = vdwg.mxu0
        %v354 = vld [vmem:[%s263] sm:$0xff]
        %v355 = vadd.f32 %v351, %v354
        %vm356 = vcmask 261120
        %v357 = vsel %vm356, %v355, 0.0
        %358 = vadd.xlane.f32.xlu0 %v357
        %v359 = vpop.xlane.xlu0 %358
        %v360 = vrcp.pop 32.0
        %v361 = vmul.f32 %v359, %v360
        %v362 = vsub.f32 %v355, %v361
        %v363 = vmul.f32 %v362, %v362
        %v364 = vsel %vm356, %v363, 0.0
        %365 = vadd.xlane.f32.xlu0 %v364
        %v366 = vpop.xlane.xlu0 %365
        %v367 = vmul.f32 %v366, %v360
        %v368 = vadd.f32 %v367, 1e-12
        %v369 = vrsqrt.pop %v368
        %v370 = vld [vmem:[%s4] sm:$0x1]
        %v372 = vlaneseq
        %v373 = vshrl.u32 %v372, 7
        %v374 = vsub.s32 0, %v373
        %v375 = vrot.slane %v370, %v374
        %v377 = vmul.f32 %v369, %v375
        %v378 = vmul.f32 %v362, %v377
        %v379 = vld [vmem:[%s5] sm:$0x1]
        %v381 = vlaneseq
        %v382 = vshrl.u32 %v381, 7
        %v383 = vsub.s32 0, %v382
        %v384 = vrot.slane %v379, %v383
        %v386 = vadd.f32 %v378, %v384
        %387 = vst.msk [vmem:[%s255] sm:$0xff] %vm356, %v386
        %s388 = sand.u32 %s164, 1
        %s389 = scalar_lea.sflag [#allocation3], %s388
        %s390 = sand.u32 %s164, 1
        %s391 = smul.addr %s390, 8
        %s392 = scalar_lea.vmem [#allocation2], %s391
        // Predicated region
        $region45: #{tpu_custom_call.1} parent=43 // pred_check
          %p393 = pneg %p174
        $region46: #{tpu_custom_call.1} parent=43 // pred_check_branch
          %395 = sbr.rel (%p393) target = $region48
        $region47: #{tpu_custom_call.1} parent=43 // pred_region
          %s397 = ssub.s32 128, 128
          %398 = vsyncadd %s389, %s397
          %s399 = smul.addr %s20, 128
          %s400 = scalar_lea.hbm %s6, %s399
          %s402 = sshll.u32 %s392, 4
          %s403 = int_to_ptr.vmem [resolvable:$true] %s402
          %405 = dma.vmem_to_hbm [thread:$0]  %s403, 128, %s400, %s389
        $region48: #{tpu_custom_call.1} parent=43 // pred_fallthru
          _
      $region44: #{tpu_custom_call.1} parent=5 // pred_fallthru
        _
      %p406 = scmp.le.s32.totalorder 2, %s15
      // Predicated region
      $region49: #{tpu_custom_call.1} parent=5 // pred_check
        %p407 = pneg %p406
      $region50: #{tpu_custom_call.1} parent=5 // pred_check_branch
        %409 = sbr.rel (%p407) target = $region52
      $region51: #{tpu_custom_call.1} parent=5 // pred_region
        %s410 = ssub.s32 %s15, 2
        // Predicated region
        $region53: #{tpu_custom_call.1} parent=51 // pred_check
          %p411 = pneg %p180
        $region54: #{tpu_custom_call.1} parent=51 // pred_check_branch
          %413 = sbr.rel (%p411) target = $region56
        $region55: #{tpu_custom_call.1} parent=51 // pred_region
          %s414 = sand.u32 %s165, 1
          %s415 = scalar_lea.sflag [#allocation3], %s414
          %s416 = sand.u32 %s165, 1
          %s417 = smul.addr %s416, 8
          %s418 = scalar_lea.vmem [#allocation2], %s417
          %419 = dma.done %s415, 128
        $region56: #{tpu_custom_call.1} parent=51 // pred_fallthru
          _
      $region52: #{tpu_custom_call.1} parent=5 // pred_fallthru
        _
    $region6: #{tpu_custom_call.1} parent=1 // loop_footer
      %s19 = sadd.s32 1, %s15
    $region7: #{tpu_custom_call.1} parent=1 // loop_footer_branch
      %14 = sbr.rel target = $region3
    $region8: #{tpu_custom_call.1} parent=1 // loop_exit
      _
    %420 = vsyncpa [#allocation3], 1
    %s421 = scalar_lea.sflag [#allocation3], 1
    %422 = vsyncpa %s421, 1

// kernel: tpu_custom_call.1
$region0: #{tpu_custom_call.1}
  #allocation0 [shape = 'u32[]', space=smem, size = 0x4, offset = 0x4, fixed_abs, tag = 'smem constant byte address 0x4 - core index']
  #allocation1 [shape = 'u32[144,128]{1,0:T(1,128)}', space=vmem, size = 0x12000, scoped, tag = 'internal scratch']
  %s0 = inlined_call_operand.vmem [shape: f32[16,64], index: 0, kind: input, shape index: {}]
  %s1 = inlined_call_operand.vmem [shape: f32[16,32], index: 1, kind: input, shape index: {}]
  %s2 = inlined_call_operand.vmem [shape: f32[64,32], index: 2, kind: input, shape index: {}]
  %s3 = inlined_call_operand.vmem [shape: f32[1,32], index: 3, kind: input, shape index: {}]
  %s4 = inlined_call_operand.vmem [shape: f32[1,32], index: 4, kind: input, shape index: {}]
  %s5 = inlined_call_operand.vmem [shape: f32[1,32], index: 5, kind: input, shape index: {}]
  %s6 = inlined_call_operand.hbm [shape: f32[16,32], index: 6, kind: output, shape index: {}]
  %s7 = sld [smem:[#allocation0]]
  $region57: #{tpu_custom_call.1} parent=0
    _
  %s9 = ssub.s32 1, %s7
  %s10 = scalar_select 0, %s9, %s7
  $region1: #{tpu_custom_call.1} parent=0
    #allocation2 [shape = 'u8[8192]{0}', space=vmem, size = 0x2000, scoped, tag = 'output window, operand 0']
    #allocation3 [shape = 's32[2]{0}', space=sflag, size = 0x8, scoped, tag = 'scoped memory for tpu_custom_call.1']
    %11 = vsyncpa [#allocation3], 0
    %s12 = scalar_lea.sflag [#allocation3], 1
    %13 = vsyncpa %s12, 0
    loop: start=0, step=1, limit=4
    $region2: #{tpu_custom_call.1} parent=1 // loop_pre_header
      _
    $region3: #{tpu_custom_call.1} parent=1 // loop_header
      %s15 = sphi 0, %s19
      %p16 = scmp.ge.s32.totalorder %s15, 4
      %s25 = sphi 0, %s27
      %s28 = sphi 0, %s25
      %s29 = sphi 0, %s28
      %s45 = sphi 0, %s29
      %s51 = sphi 0, %s53
      %s54 = sphi 0, %s51
      %s55 = sphi 0, %s54
      %s71 = sphi 0, %s55
      %s75 = sphi 0, %s75
      %s77 = sphi 0, %s75
      %s78 = sphi 0, %s77
      %s92 = sphi 0, %s78
      %s96 = sphi 0, %s96
      %s98 = sphi 0, %s96
      %s99 = sphi 0, %s98
      %s113 = sphi 0, %s99
      %s117 = sphi 0, %s117
      %s119 = sphi 0, %s117
      %s120 = sphi 0, %s119
      %s134 = sphi 0, %s120
      %s138 = sphi 0, %s138
      %s140 = sphi 0, %s138
      %s141 = sphi 0, %s140
      %s155 = sphi 0, %s141
      %s161 = sphi 0, %s163
      %s164 = sphi 0, %s161
      %s165 = sphi 0, %s164
      %s181 = sphi 0, %s165
    $region4: #{tpu_custom_call.1} parent=1 // loop_header_branch
      %18 = sbr.rel (%p16) target = $region8
    $region5: #{tpu_custom_call.1} parent=1 // loop_body
      %s20 = ssub.s32 %s15, 1
      %s21 = ssub.s32 %s15, 2
      %s22 = sadd.s32 %s15, 1
      %s23 = ssub.s32 %s15, %s22
      %p24 = scmp.eq.s32.totalorder %s23, 0
      %s26 = sadd.s32 %s25, 1
      %s27 = scalar_select %p24, %s25, %s26
      %p30 = pneg %p24
      %p31 = scmp.eq.s32.totalorder %s15, 1
      %p32 = por %p30, %p31
      %p33 = scmp.ne.s32.totalorder %s25, %s28
      %p34 = scmp.eq.s32.totalorder %s15, 0
      %p35 = por %p33, %p34
      %p36 = scmp.ne.s32.totalorder %s25, %s28
      %p37 = scmp.eq.s32.totalorder %s20, 1
      %p38 = por %p36, %p37
      %p39 = scmp.ne.s32.totalorder %s28, %s29
      %p40 = scmp.eq.s32.totalorder %s20, 0
      %p41 = por %p39, %p40
      %p42 = scmp.ne.s32.totalorder %s28, %s29
      %p43 = scmp.eq.s32.totalorder %s21, 1
      %p44 = por %p42, %p43
      %p46 = scmp.ne.s32.totalorder %s29, %s45
      %p47 = scmp.eq.s32.totalorder %s21, 0
      %p48 = por %p46, %p47
      %s49 = ssub.s32 %s15, %s22
      %p50 = scmp.eq.s32.totalorder %s49, 0
      %s52 = sadd.s32 %s51, 1
      %s53 = scalar_select %p50, %s51, %s52
      %p56 = pneg %p50
      %p57 = scmp.eq.s32.totalorder %s15, 1
      %p58 = por %p56, %p57
      %p59 = scmp.ne.s32.totalorder %s51, %s54
      %p60 = scmp.eq.s32.totalorder %s15, 0
      %p61 = por %p59, %p60
      %p62 = scmp.ne.s32.totalorder %s51, %s54
      %p63 = scmp.eq.s32.totalorder %s20, 1
      %p64 = por %p62, %p63
      %p65 = scmp.ne.s32.totalorder %s54, %s55
      %p66 = scmp.eq.s32.totalorder %s20, 0
      %p67 = por %p65, %p66
      %p68 = scmp.ne.s32.totalorder %s54, %s55
      %p69 = scmp.eq.s32.totalorder %s21, 1
      %p70 = por %p68, %p69
      %p72 = scmp.ne.s32.totalorder %s55, %s71
      %p73 = scmp.eq.s32.totalorder %s21, 0
      %p74 = por %p72, %p73
      %s76 = sadd.s32 %s75, 1
      %p79 = scmp.eq.s32.totalorder %s15, 1
      %p80 = scmp.ne.s32.totalorder %s75, %s77
      %p81 = scmp.eq.s32.totalorder %s15, 0
      %p82 = por %p80, %p81
      %p83 = scmp.ne.s32.totalorder %s75, %s77
      %p84 = scmp.eq.s32.totalorder %s20, 1
      %p85 = por %p83, %p84
      %p86 = scmp.ne.s32.totalorder %s77, %s78
      %p87 = scmp.eq.s32.totalorder %s20, 0
      %p88 = por %p86, %p87
      %p89 = scmp.ne.s32.totalorder %s77, %s78
      %p90 = scmp.eq.s32.totalorder %s21, 1
      %p91 = por %p89, %p90
      %p93 = scmp.ne.s32.totalorder %s78, %s92
      %p94 = scmp.eq.s32.totalorder %s21, 0
      %p95 = por %p93, %p94
      %s97 = sadd.s32 %s96, 1
      %p100 = scmp.eq.s32.totalorder %s15, 1
      %p101 = scmp.ne.s32.totalorder %s96, %s98
      %p102 = scmp.eq.s32.totalorder %s15, 0
      %p103 = por %p101, %p102
      %p104 = scmp.ne.s32.totalorder %s96, %s98
      %p105 = scmp.eq.s32.totalorder %s20, 1
      %p106 = por %p104, %p105
      %p107 = scmp.ne.s32.totalorder %s98, %s99
      %p108 = scmp.eq.s32.totalorder %s20, 0
      %p109 = por %p107, %p108
      %p110 = scmp.ne.s32.totalorder %s98, %s99
      %p111 = scmp.eq.s32.totalorder %s21, 1
      %p112 = por %p110, %p111
      %p114 = scmp.ne.s32.totalorder %s99, %s113
      %p115 = scmp.eq.s32.totalorder %s21, 0
      %p116 = por %p114, %p115
      %s118 = sadd.s32 %s117, 1
      %p121 = scmp.eq.s32.totalorder %s15, 1
      %p122 = scmp.ne.s32.totalorder %s117, %s119
      %p123 = scmp.eq.s32.totalorder %s15, 0
      %p124 = por %p122, %p123
      %p125 = scmp.ne.s32.totalorder %s117, %s119
      %p126 = scmp.eq.s32.totalorder %s20, 1
      %p127 = por %p125, %p126
      %p128 = scmp.ne.s32.totalorder %s119, %s120
      %p129 = scmp.eq.s32.totalorder %s20, 0
      %p130 = por %p128, %p129
      %p131 = scmp.ne.s32.totalorder %s119, %s120
      %p132 = scmp.eq.s32.totalorder %s21, 1
      %p133 = por %p131, %p132
      %p135 = scmp.ne.s32.totalorder %s120, %s134
      %p136 = scmp.eq.s32.totalorder %s21, 0
      %p137 = por %p135, %p136
      %s139 = sadd.s32 %s138, 1
      %p142 = scmp.eq.s32.totalorder %s15, 1
      %p143 = scmp.ne.s32.totalorder %s138, %s140
      %p144 = scmp.eq.s32.totalorder %s15, 0
      %p145 = por %p143, %p144
      %p146 = scmp.ne.s32.totalorder %s138, %s140
      %p147 = scmp.eq.s32.totalorder %s20, 1
      %p148 = por %p146, %p147
      %p149 = scmp.ne.s32.totalorder %s140, %s141
      %p150 = scmp.eq.s32.totalorder %s20, 0
      %p151 = por %p149, %p150
      %p152 = scmp.ne.s32.totalorder %s140, %s141
      %p153 = scmp.eq.s32.totalorder %s21, 1
      %p154 = por %p152, %p153
      %p156 = scmp.ne.s32.totalorder %s141, %s155
      %p157 = scmp.eq.s32.totalorder %s21, 0
      %p158 = por %p156, %p157
      %s159 = ssub.s32 %s15, %s22
      %p160 = scmp.eq.s32.totalorder %s159, 0
      %s162 = sadd.s32 %s161, 1
      %s163 = scalar_select %p160, %s161, %s162
      %p166 = pneg %p160
      %p167 = scmp.eq.s32.totalorder %s15, 1
      %p168 = por %p166, %p167
      %p169 = scmp.ne.s32.totalorder %s161, %s164
      %p170 = scmp.eq.s32.totalorder %s15, 0
      %p171 = por %p169, %p170
      %p172 = scmp.ne.s32.totalorder %s161, %s164
      %p173 = scmp.eq.s32.totalorder %s20, 1
      %p174 = por %p172, %p173
      %p175 = scmp.ne.s32.totalorder %s164, %s165
      %p176 = scmp.eq.s32.totalorder %s20, 0
      %p177 = por %p175, %p176
      %p178 = scmp.ne.s32.totalorder %s164, %s165
      %p179 = scmp.eq.s32.totalorder %s21, 1
      %p180 = por %p178, %p179
      %p182 = scmp.ne.s32.totalorder %s165, %s181
      %p183 = scmp.eq.s32.totalorder %s21, 0
      %p184 = por %p182, %p183
      %p185 = scmp.le.s32.totalorder 1, %s15
      %p186 = scmp.lt.s32.totalorder %s15, 3
      %p187 = pnand %p185, %p186
      %p188 = pneg %p187
      // Predicated region
      $region9: #{tpu_custom_call.1} parent=5 // pred_check
        _
      $region10: #{tpu_custom_call.1} parent=5 // pred_check_branch
        %190 = sbr.rel (%p187) target = $region12
      $region11: #{tpu_custom_call.1} parent=5 // pred_region
        %s191 = ssub.s32 %s15, 1
        // Predicated region
        $region13: #{tpu_custom_call.1} parent=11 // pred_check
          %p192 = pneg %p88
        $region14: #{tpu_custom_call.1} parent=11 // pred_check_branch
          %194 = sbr.rel (%p192) target = $region16
        $region15: #{tpu_custom_call.1} parent=11 // pred_region
          _
        $region16: #{tpu_custom_call.1} parent=11 // pred_fallthru
          _
        // Predicated region
        $region17: #{tpu_custom_call.1} parent=11 // pred_check
          %p195 = pneg %p109
        $region18: #{tpu_custom_call.1} parent=11 // pred_check_branch
          %197 = sbr.rel (%p195) target = $region20
        $region19: #{tpu_custom_call.1} parent=11 // pred_region
          _
        $region20: #{tpu_custom_call.1} parent=11 // pred_fallthru
          _
        // Predicated region
        $region21: #{tpu_custom_call.1} parent=11 // pred_check
          %p198 = pneg %p130
        $region22: #{tpu_custom_call.1} parent=11 // pred_check_branch
          %200 = sbr.rel (%p198) target = $region24
        $region23: #{tpu_custom_call.1} parent=11 // pred_region
          _
        $region24: #{tpu_custom_call.1} parent=11 // pred_fallthru
          _
        // Predicated region
        $region25: #{tpu_custom_call.1} parent=11 // pred_check
          %p201 = pneg %p151
        $region26: #{tpu_custom_call.1} parent=11 // pred_check_branch
          %203 = sbr.rel (%p201) target = $region28
        $region27: #{tpu_custom_call.1} parent=11 // pred_region
          _
        $region28: #{tpu_custom_call.1} parent=11 // pred_fallthru
          _
      $region12: #{tpu_custom_call.1} parent=5 // pred_fallthru
        _
      %p204 = scmp.lt.s32.totalorder %s15, 2
      // Predicated region
      $region29: #{tpu_custom_call.1} parent=5 // pred_check
        %p205 = pneg %p204
      $region30: #{tpu_custom_call.1} parent=5 // pred_check_branch
        %207 = sbr.rel (%p205) target = $region32
      $region31: #{tpu_custom_call.1} parent=5 // pred_region
        // Predicated region
        $region33: #{tpu_custom_call.1} parent=31 // pred_check
          %p208 = pneg %p35
        $region34: #{tpu_custom_call.1} parent=31 // pred_check_branch
          %210 = sbr.rel (%p208) target = $region36
        $region35: #{tpu_custom_call.1} parent=31 // pred_region
          %p211 = scmp.lt.s32.totalorder %s15, 1
          %s212 = scalar_select %p211, %s15, 1
          %s213 = smul.addr %s212, 8
          %s214 = scalar_lea.vmem %s0, %s213
        $region36: #{tpu_custom_call.1} parent=31 // pred_fallthru
          _
        // Predicated region
        $region37: #{tpu_custom_call.1} parent=31 // pred_check
          %p215 = pneg %p61
        $region38: #{tpu_custom_call.1} parent=31 // pred_check_branch
          %217 = sbr.rel (%p215) target = $region40
        $region39: #{tpu_custom_call.1} parent=31 // pred_region
          %p218 = scmp.lt.s32.totalorder %s15, 1
          %s219 = scalar_select %p218, %s15, 1
          %s220 = smul.addr %s219, 8
          %s221 = scalar_lea.vmem %s1, %s220
        $region40: #{tpu_custom_call.1} parent=31 // pred_fallthru
          _
      $region32: #{tpu_custom_call.1} parent=5 // pred_fallthru
        _
      %p222 = scmp.le.s32.totalorder 1, %s15
      %p223 = scmp.lt.s32.totalorder %s15, 3
      %p224 = pnand %p222, %p223
      %p225 = pneg %p224
      // Predicated region
      $region41: #{tpu_custom_call.1} parent=5 // pred_check
        _
      $region42: #{tpu_custom_call.1} parent=5 // pred_check_branch
        %227 = sbr.rel (%p224) target = $region44
      $region43: #{tpu_custom_call.1} parent=5 // pred_region
        %s228 = ssub.s32 %s15, 1
        %p229 = scmp.lt.s32.totalorder %s20, 1
        %s230 = scalar_select %p229, %s20, 1
        %s231 = smul.addr %s230, 8
        %s232 = scalar_lea.vmem %s0, %s231
        %p233 = pneg %p41
        %p234 = pneg %p38
        %p235 = scmp.lt.s32.totalorder %s20, 1
        %s236 = scalar_select %p235, %s20, 1
        %s237 = smul.addr %s236, 8
        %s238 = scalar_lea.vmem %s1, %s237
        %p239 = pneg %p67
        %p240 = pneg %p64
        %p241 = pneg %p88
        %p242 = pneg %p85
        %p243 = pneg %p109
        %p244 = pneg %p106
        %p245 = pneg %p130
        %p246 = pneg %p127
        %p247 = pneg %p151
        %p248 = pneg %p148
        %p249 = pneg %p177
        %p250 = pneg %p174
        %s251 = sand.u32 %s164, 1
        %s252 = scalar_lea.sflag [#allocation3], %s251
        %s253 = sand.u32 %s164, 1
        %s254 = smul.addr %s253, 8
        %s255 = scalar_lea.vmem [#allocation2], %s254
        %p256 = scmp.lt.s32.totalorder %s20, 1
        %s257 = scalar_select %p256, %s20, 1
        %s258 = smul.addr %s257, 8
        %s259 = scalar_lea.vmem %s0, %s258
        %p260 = scmp.lt.s32.totalorder %s20, 1
        %s261 = scalar_select %p260, %s20, 1
        %s262 = smul.addr %s261, 8
        %s263 = scalar_lea.vmem %s1, %s262
        %v264 = vld [vmem:[%s259] sm:$0xff]
        %v265 = vld [vmem:[%s2] sm:$0xff]
        %v266 = vld [vmem:[%s2 + $0x8] sm:$0xff]
        %v267 = vld [vmem:[%s2 + $0x10] sm:$0xff]
        %v268 = vld [vmem:[%s2 + $0x18] sm:$0xff]
        %v269 = vld [vmem:[%s2 + $0x20] sm:$0xff]
        %v270 = vld [vmem:[%s2 + $0x28] sm:$0xff]
        %v271 = vld [vmem:[%s2 + $0x30] sm:$0xff]
        %v272 = vld [vmem:[%s2 + $0x38] sm:$0xff]
        %v273 = vld [vmem:[%s3] sm:$0x1]
        %v275 = vlaneseq
        %v276 = vshrl.u32 %v275, 7
        %v277 = vsub.s32 0, %v276
        %v278 = vrot.slane %v273, %v277
        %vm280 = vcmask 523264
        %v282 = vsel %vm280, %v264, 0
        %284 = vmatprep.subr.mxu0 0.0
        %285 = vmatpush1.msra.mxu0 0.0
        %286 = vmatprep.subr.mxu0 0.0
        %287 = vmatpush1.msra.mxu0 0.0
        %288 = vmatprep.subr.mxu0 0.0
        %289 = vmatpush1.msra.mxu0 0.0
        %290 = vmatprep.subr.mxu0 0.0
        %291 = vmatpush1.msra.mxu0 0.0
        %292 = vmatprep.subr.mxu0 0.0
        %293 = vmatpush1.msra.mxu0 0.0
        %294 = vmatprep.subr.mxu0 0.0
        %295 = vmatpush1.msra.mxu0 0.0
        %296 = vmatprep.subr.mxu0 0.0
        %297 = vmatpush1.msra.mxu0 0.0
        %298 = vmatprep.subr.mxu0 0.0
        %299 = vmatpush1.msra.mxu0 0.0
        %300 = vmatprep.subr.mxu0 0.0
        %301 = vmatpush1.msra.mxu0 %v272
        %302 = vmatprep.subr.mxu0 0.0
        %303 = vmatpush1.msra.mxu0 %v271
        %304 = vmatprep.subr.mxu0 0.0
        %305 = vmatpush1.msra.mxu0 %v270
        %306 = vmatprep.subr.mxu0 0.0
        %307 = vmatpush1.msra.mxu0 %v269
        %308 = vmatprep.subr.mxu0 0.0
        %309 = vmatpush1.msra.mxu0 %v268
        %310 = vmatprep.subr.mxu0 0.0
        %311 = vmatpush1.msra.mxu0 %v267
        %312 = vmatprep.subr.mxu0 0.0
        %313 = vmatpush1.msra.mxu0 %v266
        %314 = vmatprep.subr.mxu0 0.0
        %315 = vmatpush1.msra.mxu0 %v265
        %316 = vmatprep.subr.mxu0 0.0
        %317 = vmatpush2.msra.mxu0 0.0
        %318 = vmatprep.subr.mxu0 0.0
        %319 = vmatpush2.msra.mxu0 0.0
        %320 = vmatprep.subr.mxu0 0.0
        %321 = vmatpush2.msra.mxu0 0.0
        %322 = vmatprep.subr.mxu0 0.0
        %323 = vmatpush2.msra.mxu0 0.0
        %324 = vmatprep.subr.mxu0 0.0
        %325 = vmatpush2.msra.mxu0 0.0
        %326 = vmatprep.subr.mxu0 0.0
        %327 = vmatpush2.msra.mxu0 0.0
        %328 = vmatprep.subr.mxu0 0.0
        %329 = vmatpush2.msra.mxu0 0.0
        %330 = vmatprep.subr.mxu0 0.0
        %331 = vmatpush2.msra.mxu0 0.0
        %332 = vmatprep.subr.mxu0 0.0
        %333 = vmatpush2.msra.mxu0 0.0
        %334 = vmatprep.subr.mxu0 0.0
        %335 = vmatpush2.msra.mxu0 0.0
        %336 = vmatprep.subr.mxu0 0.0
        %337 = vmatpush2.msra.mxu0 0.0
        %338 = vmatprep.subr.mxu0 0.0
        %339 = vmatpush2.msra.mxu0 0.0
        %340 = vmatprep.subr.mxu0 0.0
        %341 = vmatpush2.msra.mxu0 0.0
        %342 = vmatprep.subr.mxu0 0.0
        %343 = vmatpush2.msra.mxu0 0.0
        %344 = vmatprep.subr.mxu0 0.0
        %345 = vmatpush2.msra.mxu0 0.0
        %346 = vmatprep.subr.mxu0 0.0
        %347 = vmatpush2.msra.mxu0 0.0
        %348 = vmatprep.mubr.f32.mxu0 0.0
        %349 = vmatmul.mubr.f32.gmra.mxu0 %v282
        %v350 = vpop.f32.mrf.mxu0
        %v351 = vadd.f32 %v278, %v350
        %v352 = vpop.f32.mrf.mxu0
        %353 = vdwg.mxu0
        %v354 = vld [vmem:[%s263] sm:$0xff]
        %v355 = vadd.f32 %v351, %v354
        %vm356 = vcmask 261120
        %v357 = vsel %vm356, %v355, 0.0
        %358 = vadd.xlane.f32.xlu0 %v357
        %v359 = vpop.xlane.xlu0 %358
        %v360 = vrcp.pop 32.0
        %v361 = vmul.f32 %v359, %v360
        %v362 = vsub.f32 %v355, %v361
        %v363 = vmul.f32 %v362, %v362
        %v364 = vsel %vm356, %v363, 0.0
        %365 = vadd.xlane.f32.xlu0 %v364
        %v366 = vpop.xlane.xlu0 %365
        %v367 = vmul.f32 %v366, %v360
        %v368 = vadd.f32 %v367, 1e-12
        %v369 = vrsqrt.pop %v368
        %v370 = vld [vmem:[%s4] sm:$0x1]
        %v372 = vlaneseq
        %v373 = vshrl.u32 %v372, 7
        %v374 = vsub.s32 0, %v373
        %v375 = vrot.slane %v370, %v374
        %v377 = vmul.f32 %v369, %v375
        %v378 = vmul.f32 %v362, %v377
        %v379 = vld [vmem:[%s5] sm:$0x1]
        %v381 = vlaneseq
        %v382 = vshrl.u32 %v381, 7
        %v383 = vsub.s32 0, %v382
        %v384 = vrot.slane %v379, %v383
        %v386 = vadd.f32 %v378, %v384
        %387 = vst.msk [vmem:[%s255] sm:$0xff] %vm356, %v386
        %s388 = sand.u32 %s164, 1
        %s389 = scalar_lea.sflag [#allocation3], %s388
        %s390 = sand.u32 %s164, 1
        %s391 = smul.addr %s390, 8
        %s392 = scalar_lea.vmem [#allocation2], %s391
        // Predicated region
        $region45: #{tpu_custom_call.1} parent=43 // pred_check
          %p393 = pneg %p174
        $region46: #{tpu_custom_call.1} parent=43 // pred_check_branch
          %395 = sbr.rel (%p393) target = $region48
        $region47: #{tpu_custom_call.1} parent=43 // pred_region
          %s397 = ssub.s32 128, 128
          %398 = vsyncadd %s389, %s397
          %s399 = smul.addr %s20, 128
          %s400 = scalar_lea.hbm %s6, %s399
          %s402 = sshll.u32 %s392, 4
          %s403 = int_to_ptr.vmem [resolvable:$true] %s402
          %405 = dma.vmem_to_hbm [thread:$0]  %s403, 128, %s400, %s389
        $region48: #{tpu_custom_call.1} parent=43 // pred_fallthru
          _
      $region44: #{tpu_custom_call.1} parent=5 // pred_fallthru
        _
      %p406 = scmp.le.s32.totalorder 2, %s15
      // Predicated region
      $region49: #{tpu_custom_call.1} parent=5 // pred_check
        %p407 = pneg %p406
      $region50: #{tpu_custom_call.1} parent=5 // pred_check_branch
        %409 = sbr.rel (%p407) target = $region52
      $region51: #{tpu_custom_call.1} parent=5 // pred_region
        %s410 = ssub.s32 %s15, 2
        // Predicated region
        $region53: #{tpu_custom_call.1} parent=51 // pred_check
          %p411 = pneg %p180
        $region54: #{tpu_custom_call.1} parent=51 // pred_check_branch
          %413 = sbr.rel (%p411) target = $region56
        $region55: #{tpu_custom_call.1} parent=51 // pred_region
          %s414 = sand.u32 %s165, 1
          %s415 = scalar_lea.sflag [#allocation3], %s414
          %s416 = sand.u32 %s165, 1
          %s417 = smul.addr %s416, 8
          %s418 = scalar_lea.vmem [#allocation2], %s417
          %419 = dma.done %s415, 128
        $region56: #{tpu_custom_call.1} parent=51 // pred_fallthru
          _
      $region52: #{tpu_custom_call.1} parent=5 // pred_fallthru
        _
    $region6: #{tpu_custom_call.1} parent=1 // loop_footer
      %s19 = sadd.s32 1, %s15
    $region7: #{tpu_custom_call.1} parent=1 // loop_footer_branch
      %14 = sbr.rel target = $region3
    $region8: #{tpu_custom_call.1} parent=1 // loop_exit
      _
    %420 = vsyncpa [#allocation3], 1
    %s421 = scalar_lea.sflag [#allocation3], 1
    %422 = vsyncpa %s421, 1

</llo_original>
